<compile_context>
chip_gen: v7x
topology: tpu7x:2x2x1
jax: 0.10.0
libtpu: 0.0.40
codegen_flags: <defaults>
</compile_context>

<pallas_src>
import jax
import jax.numpy as jnp
from jax.experimental import pallas as pl
from jax.experimental.pallas import tpu as pltpu


def linear_relu_kernel(x_ref, w_ref, b_ref, o_ref):
    # x_ref: (B, K), w_ref: (K, N), b_ref: (1, N), o_ref: (B, N)
    x = x_ref[...]
    w = w_ref[...]
    B, K = x.shape
    N = w.shape[1]

    # Start the accumulator from the bias (read once, sublane-broadcast).
    acc = jnp.broadcast_to(b_ref[...], (B, N)).astype(jnp.float32)

    # Unrolled K-step multiply-add on the VPU — avoids a padded MXU pass for
    # this tiny contraction. (B,1) * (1,N) broadcasts stay inside one vreg.
    for k in range(K):
        acc = acc + x[:, k:k + 1].astype(jnp.float32) * w[k:k + 1, :].astype(jnp.float32)

    o_ref[...] = jnp.maximum(acc, 0.0).astype(o_ref.dtype)


def linear_relu(x, w, b):
    B, K = x.shape
    N = w.shape[1]
    return pl.pallas_call(
        linear_relu_kernel,
        out_shape=jax.ShapeDtypeStruct((B, N), x.dtype),
        in_specs=[
            pl.BlockSpec(memory_space=pltpu.MemorySpace.VMEM),  # x
            pl.BlockSpec(memory_space=pltpu.MemorySpace.VMEM),  # w
            pl.BlockSpec(memory_space=pltpu.MemorySpace.VMEM),  # b
        ],
        out_specs=pl.BlockSpec(memory_space=pltpu.MemorySpace.VMEM),
    )(x, w, b)


if __name__ == "__main__":
    key = jax.random.PRNGKey(0)
    k_x, k_w, k_b = jax.random.split(key, 3)

    in_features, out_features = 12, 4
    batch = 8  # one full f32 sublane group

    # Deterministic init mimicking PyTorch Linear: U(-1/sqrt(fan_in), 1/sqrt(fan_in))
    bound = 1.0 / jnp.sqrt(jnp.float32(in_features))
    w = jax.random.uniform(k_w, (in_features, out_features), jnp.float32, -bound, bound)
    b = jax.random.uniform(k_b, (1, out_features), jnp.float32, -bound, bound)

    x = jax.random.normal(k_x, (batch, in_features), jnp.float32)

    out = linear_relu(x, w, b)
    jax.block_until_ready(out)

    # Reference check
    ref = jnp.maximum(x @ w + b, 0.0)
    assert out.shape == (batch, out_features)
    assert jnp.allclose(out, ref, atol=1e-5, rtol=1e-5)

    print("KERNEL_OK")
</pallas_src>

<mosaic_0001>
module attributes {stable_mosaic.version = 11 : i64} {
  func.func @linear_relu_kernel(%arg0: memref<8x12xf32, #tpu.memory_space<vmem>>, %arg1: memref<12x4xf32, #tpu.memory_space<vmem>>, %arg2: memref<1x4xf32, #tpu.memory_space<vmem>>, %arg3: memref<8x4xf32, #tpu.memory_space<vmem>>) attributes {dimension_semantics = [], scalar_prefetch = 0 : i64, scratch_operands = 0 : i64, tpu.core_type = #tpu.core_type<tc>} {
    %c0 = arith.constant 0 : index
    %c0_0 = arith.constant 0 : index
    %0 = vector.load %arg0[%c0, %c0_0] : memref<8x12xf32, #tpu.memory_space<vmem>>, vector<8x12xf32>
    %c0_1 = arith.constant 0 : index
    %c0_2 = arith.constant 0 : index
    %1 = vector.load %arg1[%c0_1, %c0_2] : memref<12x4xf32, #tpu.memory_space<vmem>>, vector<12x4xf32>
    %c0_3 = arith.constant 0 : index
    %c0_4 = arith.constant 0 : index
    %2 = vector.load %arg2[%c0_3, %c0_4] : memref<1x4xf32, #tpu.memory_space<vmem>>, vector<1x4xf32>
    %3 = vector.shape_cast %2 : vector<1x4xf32> to vector<1x4xf32>
    %4 = vector.broadcast %3 : vector<1x4xf32> to vector<8x4xf32>
    %5 = vector.extract_strided_slice %0 {offsets = [0, 0], sizes = [8, 1], strides = [1, 1]} : vector<8x12xf32> to vector<8x1xf32>
    %6 = vector.extract_strided_slice %1 {offsets = [0, 0], sizes = [1, 4], strides = [1, 1]} : vector<12x4xf32> to vector<1x4xf32>
    %7 = vector.broadcast %5 : vector<8x1xf32> to vector<8x4xf32>
    %8 = vector.broadcast %6 : vector<1x4xf32> to vector<8x4xf32>
    %9 = arith.mulf %7, %8 : vector<8x4xf32>
    %10 = arith.addf %4, %9 : vector<8x4xf32>
    %11 = vector.extract_strided_slice %0 {offsets = [0, 1], sizes = [8, 1], strides = [1, 1]} : vector<8x12xf32> to vector<8x1xf32>
    %12 = vector.extract_strided_slice %1 {offsets = [1, 0], sizes = [1, 4], strides = [1, 1]} : vector<12x4xf32> to vector<1x4xf32>
    %13 = vector.broadcast %11 : vector<8x1xf32> to vector<8x4xf32>
    %14 = vector.broadcast %12 : vector<1x4xf32> to vector<8x4xf32>
    %15 = arith.mulf %13, %14 : vector<8x4xf32>
    %16 = arith.addf %10, %15 : vector<8x4xf32>
    %17 = vector.extract_strided_slice %0 {offsets = [0, 2], sizes = [8, 1], strides = [1, 1]} : vector<8x12xf32> to vector<8x1xf32>
    %18 = vector.extract_strided_slice %1 {offsets = [2, 0], sizes = [1, 4], strides = [1, 1]} : vector<12x4xf32> to vector<1x4xf32>
    %19 = vector.broadcast %17 : vector<8x1xf32> to vector<8x4xf32>
    %20 = vector.broadcast %18 : vector<1x4xf32> to vector<8x4xf32>
    %21 = arith.mulf %19, %20 : vector<8x4xf32>
    %22 = arith.addf %16, %21 : vector<8x4xf32>
    %23 = vector.extract_strided_slice %0 {offsets = [0, 3], sizes = [8, 1], strides = [1, 1]} : vector<8x12xf32> to vector<8x1xf32>
    %24 = vector.extract_strided_slice %1 {offsets = [3, 0], sizes = [1, 4], strides = [1, 1]} : vector<12x4xf32> to vector<1x4xf32>
    %25 = vector.broadcast %23 : vector<8x1xf32> to vector<8x4xf32>
    %26 = vector.broadcast %24 : vector<1x4xf32> to vector<8x4xf32>
    %27 = arith.mulf %25, %26 : vector<8x4xf32>
    %28 = arith.addf %22, %27 : vector<8x4xf32>
    %29 = vector.extract_strided_slice %0 {offsets = [0, 4], sizes = [8, 1], strides = [1, 1]} : vector<8x12xf32> to vector<8x1xf32>
    %30 = vector.extract_strided_slice %1 {offsets = [4, 0], sizes = [1, 4], strides = [1, 1]} : vector<12x4xf32> to vector<1x4xf32>
    %31 = vector.broadcast %29 : vector<8x1xf32> to vector<8x4xf32>
    %32 = vector.broadcast %30 : vector<1x4xf32> to vector<8x4xf32>
    %33 = arith.mulf %31, %32 : vector<8x4xf32>
    %34 = arith.addf %28, %33 : vector<8x4xf32>
    %35 = vector.extract_strided_slice %0 {offsets = [0, 5], sizes = [8, 1], strides = [1, 1]} : vector<8x12xf32> to vector<8x1xf32>
    %36 = vector.extract_strided_slice %1 {offsets = [5, 0], sizes = [1, 4], strides = [1, 1]} : vector<12x4xf32> to vector<1x4xf32>
    %37 = vector.broadcast %35 : vector<8x1xf32> to vector<8x4xf32>
    %38 = vector.broadcast %36 : vector<1x4xf32> to vector<8x4xf32>
    %39 = arith.mulf %37, %38 : vector<8x4xf32>
    %40 = arith.addf %34, %39 : vector<8x4xf32>
    %41 = vector.extract_strided_slice %0 {offsets = [0, 6], sizes = [8, 1], strides = [1, 1]} : vector<8x12xf32> to vector<8x1xf32>
    %42 = vector.extract_strided_slice %1 {offsets = [6, 0], sizes = [1, 4], strides = [1, 1]} : vector<12x4xf32> to vector<1x4xf32>
    %43 = vector.broadcast %41 : vector<8x1xf32> to vector<8x4xf32>
    %44 = vector.broadcast %42 : vector<1x4xf32> to vector<8x4xf32>
    %45 = arith.mulf %43, %44 : vector<8x4xf32>
    %46 = arith.addf %40, %45 : vector<8x4xf32>
    %47 = vector.extract_strided_slice %0 {offsets = [0, 7], sizes = [8, 1], strides = [1, 1]} : vector<8x12xf32> to vector<8x1xf32>
    %48 = vector.extract_strided_slice %1 {offsets = [7, 0], sizes = [1, 4], strides = [1, 1]} : vector<12x4xf32> to vector<1x4xf32>
    %49 = vector.broadcast %47 : vector<8x1xf32> to vector<8x4xf32>
    %50 = vector.broadcast %48 : vector<1x4xf32> to vector<8x4xf32>
    %51 = arith.mulf %49, %50 : vector<8x4xf32>
    %52 = arith.addf %46, %51 : vector<8x4xf32>
    %53 = vector.extract_strided_slice %0 {offsets = [0, 8], sizes = [8, 1], strides = [1, 1]} : vector<8x12xf32> to vector<8x1xf32>
    %54 = vector.extract_strided_slice %1 {offsets = [8, 0], sizes = [1, 4], strides = [1, 1]} : vector<12x4xf32> to vector<1x4xf32>
    %55 = vector.broadcast %53 : vector<8x1xf32> to vector<8x4xf32>
    %56 = vector.broadcast %54 : vector<1x4xf32> to vector<8x4xf32>
    %57 = arith.mulf %55, %56 : vector<8x4xf32>
    %58 = arith.addf %52, %57 : vector<8x4xf32>
    %59 = vector.extract_strided_slice %0 {offsets = [0, 9], sizes = [8, 1], strides = [1, 1]} : vector<8x12xf32> to vector<8x1xf32>
    %60 = vector.extract_strided_slice %1 {offsets = [9, 0], sizes = [1, 4], strides = [1, 1]} : vector<12x4xf32> to vector<1x4xf32>
    %61 = vector.broadcast %59 : vector<8x1xf32> to vector<8x4xf32>
    %62 = vector.broadcast %60 : vector<1x4xf32> to vector<8x4xf32>
    %63 = arith.mulf %61, %62 : vector<8x4xf32>
    %64 = arith.addf %58, %63 : vector<8x4xf32>
    %65 = vector.extract_strided_slice %0 {offsets = [0, 10], sizes = [8, 1], strides = [1, 1]} : vector<8x12xf32> to vector<8x1xf32>
    %66 = vector.extract_strided_slice %1 {offsets = [10, 0], sizes = [1, 4], strides = [1, 1]} : vector<12x4xf32> to vector<1x4xf32>
    %67 = vector.broadcast %65 : vector<8x1xf32> to vector<8x4xf32>
    %68 = vector.broadcast %66 : vector<1x4xf32> to vector<8x4xf32>
    %69 = arith.mulf %67, %68 : vector<8x4xf32>
    %70 = arith.addf %64, %69 : vector<8x4xf32>
    %71 = vector.extract_strided_slice %0 {offsets = [0, 11], sizes = [8, 1], strides = [1, 1]} : vector<8x12xf32> to vector<8x1xf32>
    %72 = vector.extract_strided_slice %1 {offsets = [11, 0], sizes = [1, 4], strides = [1, 1]} : vector<12x4xf32> to vector<1x4xf32>
    %73 = vector.broadcast %71 : vector<8x1xf32> to vector<8x4xf32>
    %74 = vector.broadcast %72 : vector<1x4xf32> to vector<8x4xf32>
    %75 = arith.mulf %73, %74 : vector<8x4xf32>
    %76 = arith.addf %70, %75 : vector<8x4xf32>
    %cst = arith.constant 0.000000e+00 : f32
    %77 = vector.broadcast %cst : f32 to vector<8x4xf32>
    %78 = arith.maximumf %76, %77 : vector<8x4xf32>
    %c0_5 = arith.constant 0 : index
    %c0_6 = arith.constant 0 : index
    %79 = vector.load %arg3[%c0_5, %c0_6] : memref<8x4xf32, #tpu.memory_space<vmem>>, vector<8x4xf32>
    tpu.vector_store %arg3[%c0_5, %c0_6], %78 {strides = array<i32>} : memref<8x4xf32, #tpu.memory_space<vmem>>, vector<8x4xf32>,
    return
  }
}

</mosaic_0001>

<llo_original>
// kernel: tpu_custom_call.1
$region0: #{tpu_custom_call.1}
  #allocation0 [shape = 'u32[]', space=smem, size = 0x4, offset = 0x4, fixed_abs, tag = 'smem constant byte address 0x4 - core index']
  #allocation1 [shape = 'u32[144,128]{1,0:T(1,128)}', space=vmem, size = 0x12000, scoped, tag = 'internal scratch']
  %s0 = inlined_call_operand.vmem [shape: f32[8,12], index: 0, kind: input, shape index: {}]
  %s1 = inlined_call_operand.vmem [shape: f32[12,4], index: 1, kind: input, shape index: {}]
  %s2 = inlined_call_operand.vmem [shape: f32[1,4], index: 2, kind: input, shape index: {}]
  %s3 = inlined_call_operand.vmem [shape: f32[8,4], index: 3, kind: output, shape index: {}]
  %s4 = sld [smem:[#allocation0]]
  $region22: #{tpu_custom_call.1} parent=0
    _
  %s6 = ssub.s32 1, %s4
  %s7 = scalar_select 0, %s6, %s4
  // Predicated region
  $region2: #{tpu_custom_call.1} parent=0 // pred_check
    _
  $region3: #{tpu_custom_call.1} parent=0 // pred_check_branch
    %9 = sbr.rel (0) target = $region5
  $region4: #{tpu_custom_call.1} parent=0 // pred_region
    _
  $region5: #{tpu_custom_call.1} parent=0 // pred_fallthru
    _
  // Predicated region
  $region6: #{tpu_custom_call.1} parent=0 // pred_check
    _
  $region7: #{tpu_custom_call.1} parent=0 // pred_check_branch
    %11 = sbr.rel (0) target = $region9
  $region8: #{tpu_custom_call.1} parent=0 // pred_region
    _
  $region9: #{tpu_custom_call.1} parent=0 // pred_fallthru
    _
  // Predicated region
  $region10: #{tpu_custom_call.1} parent=0 // pred_check
    _
  $region11: #{tpu_custom_call.1} parent=0 // pred_check_branch
    %13 = sbr.rel (0) target = $region13
  $region12: #{tpu_custom_call.1} parent=0 // pred_region
    _
  $region13: #{tpu_custom_call.1} parent=0 // pred_fallthru
    _
  %v14 = vld [vmem:[%s0] sm:$0xff]
  %v15 = vld [vmem:[%s1] sm:$0xff]
  %v16 = vld [vmem:[%s1 + $0x8] sm:$0xf]
  %v17 = vld [vmem:[%s2] sm:$0x1]
  %v19 = vlaneseq
  %v20 = vshrl.u32 %v19, 7
  %v21 = vsub.s32 0, %v20
  %v22 = vrot.slane %v17, %v21
  %25 = vset.pattern.permute.xlu0 0
  %26 = vperm.xlu0 %25, %v14
  %v27 = vpop.permute.xlu0 %26
  %v29 = vlaneseq
  %v30 = vshrl.u32 %v29, 7
  %v31 = vsub.s32 0, %v30
  %v32 = vrot.slane %v15, %v31
  %v33 = vmul.f32 %v27, %v32
  %v34 = vadd.f32 %v22, %v33
  %35 = vset.pattern.permute.xlu0 1
  %36 = vperm.xlu0 %35, %v14
  %v37 = vpop.permute.xlu0 %36
  %v39 = vlaneseq
  %v40 = vshrl.u32 %v39, 7
  %v41 = vsub.s32 1, %v40
  %v42 = vrot.slane %v15, %v41
  %v43 = vmul.f32 %v37, %v42
  %v44 = vadd.f32 %v34, %v43
  %45 = vset.pattern.permute.xlu0 2
  %46 = vperm.xlu0 %45, %v14
  %v47 = vpop.permute.xlu0 %46
  %v49 = vlaneseq
  %v50 = vshrl.u32 %v49, 7
  %v51 = vsub.s32 2, %v50
  %v52 = vrot.slane %v15, %v51
  %v53 = vmul.f32 %v47, %v52
  %v54 = vadd.f32 %v44, %v53
  %55 = vset.pattern.permute.xlu0 3
  %56 = vperm.xlu0 %55, %v14
  %v57 = vpop.permute.xlu0 %56
  %v59 = vlaneseq
  %v60 = vshrl.u32 %v59, 7
  %v61 = vsub.s32 3, %v60
  %v62 = vrot.slane %v15, %v61
  %v63 = vmul.f32 %v57, %v62
  %v64 = vadd.f32 %v54, %v63
  %65 = vset.pattern.permute.xlu0 4
  %66 = vperm.xlu0 %65, %v14
  %v67 = vpop.permute.xlu0 %66
  %v69 = vlaneseq
  %v70 = vshrl.u32 %v69, 7
  %v71 = vsub.s32 4, %v70
  %v72 = vrot.slane %v15, %v71
  %v73 = vmul.f32 %v67, %v72
  %v74 = vadd.f32 %v64, %v73
  %75 = vset.pattern.permute.xlu0 5
  %76 = vperm.xlu0 %75, %v14
  %v77 = vpop.permute.xlu0 %76
  %v79 = vlaneseq
  %v80 = vshrl.u32 %v79, 7
  %v81 = vsub.s32 5, %v80
  %v82 = vrot.slane %v15, %v81
  %v83 = vmul.f32 %v77, %v82
  %v84 = vadd.f32 %v74, %v83
  %85 = vset.pattern.permute.xlu0 6
  %86 = vperm.xlu0 %85, %v14
  %v87 = vpop.permute.xlu0 %86
  %v89 = vlaneseq
  %v90 = vshrl.u32 %v89, 7
  %v91 = vsub.s32 6, %v90
  %v92 = vrot.slane %v15, %v91
  %v93 = vmul.f32 %v87, %v92
  %v94 = vadd.f32 %v84, %v93
  %95 = vset.pattern.permute.xlu0 7
  %96 = vperm.xlu0 %95, %v14
  %v97 = vpop.permute.xlu0 %96
  %v99 = vlaneseq
  %v100 = vshrl.u32 %v99, 7
  %v101 = vsub.s32 7, %v100
  %v102 = vrot.slane %v15, %v101
  %v103 = vmul.f32 %v97, %v102
  %v104 = vadd.f32 %v94, %v103
  %105 = vset.pattern.permute.xlu0 8
  %106 = vperm.xlu0 %105, %v14
  %v107 = vpop.permute.xlu0 %106
  %v109 = vlaneseq
  %v110 = vshrl.u32 %v109, 7
  %v111 = vsub.s32 0, %v110
  %v112 = vrot.slane %v16, %v111
  %v113 = vmul.f32 %v107, %v112
  %v114 = vadd.f32 %v104, %v113
  %115 = vset.pattern.permute.xlu0 9
  %116 = vperm.xlu0 %115, %v14
  %v117 = vpop.permute.xlu0 %116
  %v119 = vlaneseq
  %v120 = vshrl.u32 %v119, 7
  %v121 = vsub.s32 1, %v120
  %v122 = vrot.slane %v16, %v121
  %v123 = vmul.f32 %v117, %v122
  %v124 = vadd.f32 %v114, %v123
  %125 = vset.pattern.permute.xlu0 10
  %126 = vperm.xlu0 %125, %v14
  %v127 = vpop.permute.xlu0 %126
  %v129 = vlaneseq
  %v130 = vshrl.u32 %v129, 7
  %v131 = vsub.s32 2, %v130
  %v132 = vrot.slane %v16, %v131
  %v133 = vmul.f32 %v127, %v132
  %v134 = vadd.f32 %v124, %v133
  %135 = vset.pattern.permute.xlu0 11
  %136 = vperm.xlu0 %135, %v14
  %v137 = vpop.permute.xlu0 %136
  %v139 = vlaneseq
  %v140 = vshrl.u32 %v139, 7
  %v141 = vsub.s32 3, %v140
  %v142 = vrot.slane %v16, %v141
  %v143 = vmul.f32 %v137, %v142
  %v144 = vadd.f32 %v134, %v143
  %v145 = vmax.f32 %v144, 0.0
  %vm146 = vcmask 31744
  %147 = vst.msk [vmem:[%s3] sm:$0xff] %vm146, %v145
  // Predicated region
  $region14: #{tpu_custom_call.1} parent=0 // pred_check
    _
  $region15: #{tpu_custom_call.1} parent=0 // pred_check_branch
    %149 = sbr.rel (0) target = $region17
  $region16: #{tpu_custom_call.1} parent=0 // pred_region
    _
  $region17: #{tpu_custom_call.1} parent=0 // pred_fallthru
    _
  // Predicated region
  $region18: #{tpu_custom_call.1} parent=0 // pred_check
    _
  $region19: #{tpu_custom_call.1} parent=0 // pred_check_branch
    %151 = sbr.rel (0) target = $region21
  $region20: #{tpu_custom_call.1} parent=0 // pred_region
    _
  $region21: #{tpu_custom_call.1} parent=0 // pred_fallthru
    _

</llo_original>
